<compile_context>
chip_gen: v7x
topology: tpu7x:2x2x1
jax: 0.10.0
libtpu: 0.0.40
codegen_flags: <defaults>
</compile_context>

<pallas_src>
import jax
import jax.numpy as jnp
from jax import lax
from jax.experimental import pallas as pl
from jax.experimental.pallas import tpu as pltpu


def _round_up(x, m):
    return ((x + m - 1) // m) * m


def _choose_block_rows(B, N, itemsize, *, vmem_budget_bytes=24 << 20, row_cap=1024):
    """Largest sublane-aligned row block whose double-buffered working set fits the budget."""
    # 2 inputs x 2 pipeline buffers x (block_rows x N x itemsize) <= budget
    bytes_per_row = 4 * N * itemsize
    br = max(8, min(row_cap, vmem_budget_bytes // max(bytes_per_row, 1)))
    br = max(8, (br // 8) * 8)            # multiple of 8 sublanes
    br = min(br, _round_up(B, 8))         # never bigger than the (padded) batch
    return int(br)


def _make_kl_kernel(B, block_rows):
    def _kl_kernel(p_ref, q_ref, o_ref):
        # Row-validity mask for the (possibly partial) last block.
        row0 = pl.program_id(0) * block_rows
        row_ids = row0 + lax.broadcasted_iota(jnp.int32, (block_rows, 1), 0)
        valid = row_ids < B

        # Zero out padded rows before the math so no undefined VMEM data (NaN/Inf)
        # enters exp/log; a zero row contributes exactly 0 to the KL sum.
        P = jnp.where(valid, p_ref[...].astype(jnp.float32), 0.0)
        Q = jnp.where(valid, q_ref[...].astype(jnp.float32), 0.0)

        # log_softmax(P) and softmax(P), reusing exp(p_shift): 2 exps/elem total.
        p_shift = P - jnp.max(P, axis=-1, keepdims=True)
        ep = jnp.exp(p_shift)
        sum_ep = jnp.sum(ep, axis=-1, keepdims=True)
        lp = p_shift - jnp.log(sum_ep)
        p = ep * (1.0 / sum_ep)           # exact divide on the (rows, 1) row sums

        # log_softmax(Q)
        q_shift = Q - jnp.max(Q, axis=-1, keepdims=True)
        lq = q_shift - jnp.log(jnp.sum(jnp.exp(q_shift), axis=-1, keepdims=True))

        contrib = jnp.where(valid, p * (lp - lq), 0.0)
        o_ref[...] = jnp.reshape(jnp.sum(contrib), (1, 1, 1))

    return _kl_kernel


def kl_divergence(P, Q, *, block_rows=None):
    """Pallas implementation of KLDivergence.forward(P, Q) -> scalar f32."""
    assert P.shape == Q.shape and P.ndim == 2
    B, N = P.shape
    itemsize = jnp.dtype(P.dtype).itemsize

    if block_rows is None:
        block_rows = _choose_block_rows(B, N, itemsize)
    num_blocks = int(pl.cdiv(B, block_rows))

    # Double-buffered input working set; raise the scoped-VMEM limit accordingly
    # (v5e defaults to 16 MiB), but stay within v7x's 64 MiB physical VMEM.
    working = 2 * 2 * block_rows * N * itemsize
    vmem_limit = int(min(max(2 * working, 32 << 20), 64 << 20))

    partials = pl.pallas_call(
        _make_kl_kernel(B, block_rows),
        out_shape=jax.ShapeDtypeStruct((num_blocks, 1, 1), jnp.float32),
        grid_spec=pltpu.PrefetchScalarGridSpec(
            num_scalar_prefetch=0,
            grid=(num_blocks,),
            in_specs=[
                pl.BlockSpec((block_rows, N), lambda i: (i, 0)),
                pl.BlockSpec((block_rows, N), lambda i: (i, 0)),
            ],
            out_specs=pl.BlockSpec((1, 1, 1), lambda i: (i, 0, 0)),
        ),
        compiler_params=pltpu.CompilerParams(
            dimension_semantics=("parallel",),   # per-block partials -> megacore-friendly
            vmem_limit_bytes=vmem_limit,
        ),
    )(P, Q)

    # torch.mean of a scalar is the scalar itself.
    return jnp.sum(partials)


def _kl_reference(P, Q):
    lp = jax.nn.log_softmax(P, axis=-1)
    lq = jax.nn.log_softmax(Q, axis=-1)
    p = jax.nn.softmax(P, axis=-1)
    return jnp.mean(jnp.sum(p * (lp - lq)))


if __name__ == "__main__":
    key = jax.random.PRNGKey(0)
    kp, kq = jax.random.split(key)
    B, N = 16, 128  # small logits: batch=16, classes=128
    P = jax.random.normal(kp, (B, N), dtype=jnp.float32)
    Q = jax.random.normal(kq, (B, N), dtype=jnp.float32)

    out = kl_divergence(P, Q)
    out = jax.block_until_ready(out)

    ref = _kl_reference(P, Q)
    assert jnp.allclose(out, ref, rtol=1e-5, atol=1e-5), (out, ref)

    print("KERNEL_OK")
</pallas_src>

<mosaic_0001>
module attributes {stable_mosaic.version = 11 : i64} {
  func.func @_kl_kernel(%arg0: i32, %arg1: memref<16x128xf32, #tpu.memory_space<vmem>>, %arg2: memref<16x128xf32, #tpu.memory_space<vmem>>, %arg3: memref<1x1x1xf32, #tpu.memory_space<vmem>>) attributes {dimension_semantics = [#tpu.dimension_semantics<parallel>], iteration_bounds = array<i64: 1>, scalar_prefetch = 0 : i64, scratch_operands = 0 : i64, tpu.core_type = #tpu.core_type<tc>, window_params = [{transform_indices = @transform_0, window_bounds = array<i64: 16, 128>}, {transform_indices = @transform_1, window_bounds = array<i64: 16, 128>}, {transform_indices = @transform_2, window_bounds = array<i64: 1, 1, 1>}]} {
    %c16_i32 = arith.constant 16 : i32
    %0 = arith.muli %arg0, %c16_i32 : i32
    %1 = tpu.iota {dimensions = array<i32: 0>} : vector<16x1xi32>
    %2 = vector.broadcast %0 : i32 to vector<16x1xi32>
    %3 = arith.addi %2, %1 : vector<16x1xi32>
    %c16_i32_0 = arith.constant 16 : i32
    %4 = vector.broadcast %c16_i32_0 : i32 to vector<16x1xi32>
    %5 = arith.cmpi slt, %3, %4 : vector<16x1xi32>
    %c0 = arith.constant 0 : index
    %c0_1 = arith.constant 0 : index
    %6 = vector.load %arg1[%c0, %c0_1] : memref<16x128xf32, #tpu.memory_space<vmem>>, vector<16x128xf32>
    %cst = arith.constant 0.000000e+00 : f32
    %7 = vector.shape_cast %5 : vector<16x1xi1> to vector<16x1xi1>
    %8 = vector.broadcast %7 : vector<16x1xi1> to vector<16x128xi1>
    %9 = vector.broadcast %cst : f32 to vector<16x128xf32>
    %10 = arith.select %8, %6, %9 : vector<16x128xi1>, vector<16x128xf32>
    %c0_2 = arith.constant 0 : index
    %c0_3 = arith.constant 0 : index
    %11 = vector.load %arg2[%c0_2, %c0_3] : memref<16x128xf32, #tpu.memory_space<vmem>>, vector<16x128xf32>
    %cst_4 = arith.constant 0.000000e+00 : f32
    %12 = vector.shape_cast %5 : vector<16x1xi1> to vector<16x1xi1>
    %13 = vector.broadcast %12 : vector<16x1xi1> to vector<16x128xi1>
    %14 = vector.broadcast %cst_4 : f32 to vector<16x128xf32>
    %15 = arith.select %13, %11, %14 : vector<16x128xi1>, vector<16x128xf32>
    %cst_5 = arith.constant dense<0xFF800000> : vector<16xf32>
    %16 = vector.multi_reduction <maximumf>, %10, %cst_5 [1] : vector<16x128xf32> to vector<16xf32>
    %17 = vector.shape_cast %16 : vector<16xf32> to vector<16x1xf32>
    %18 = vector.broadcast %17 : vector<16x1xf32> to vector<16x128xf32>
    %19 = arith.subf %10, %18 : vector<16x128xf32>
    %20 = math.exp %19 : vector<16x128xf32>
    %cst_6 = arith.constant dense<0.000000e+00> : vector<16xf32>
    %21 = vector.multi_reduction <add>, %20, %cst_6 [1] : vector<16x128xf32> to vector<16xf32>
    %22 = vector.shape_cast %21 : vector<16xf32> to vector<16x1xf32>
    %23 = math.log %22 : vector<16x1xf32>
    %24 = vector.broadcast %23 : vector<16x1xf32> to vector<16x128xf32>
    %25 = arith.subf %19, %24 : vector<16x128xf32>
    %cst_7 = arith.constant 1.000000e+00 : f32
    %26 = vector.broadcast %cst_7 : f32 to vector<16x1xf32>
    %27 = arith.divf %26, %22 : vector<16x1xf32>
    %28 = vector.broadcast %27 : vector<16x1xf32> to vector<16x128xf32>
    %29 = arith.mulf %20, %28 : vector<16x128xf32>
    %cst_8 = arith.constant dense<0xFF800000> : vector<16xf32>
    %30 = vector.multi_reduction <maximumf>, %15, %cst_8 [1] : vector<16x128xf32> to vector<16xf32>
    %31 = vector.shape_cast %30 : vector<16xf32> to vector<16x1xf32>
    %32 = vector.broadcast %31 : vector<16x1xf32> to vector<16x128xf32>
    %33 = arith.subf %15, %32 : vector<16x128xf32>
    %34 = math.exp %33 : vector<16x128xf32>
    %cst_9 = arith.constant dense<0.000000e+00> : vector<16xf32>
    %35 = vector.multi_reduction <add>, %34, %cst_9 [1] : vector<16x128xf32> to vector<16xf32>
    %36 = vector.shape_cast %35 : vector<16xf32> to vector<16x1xf32>
    %37 = math.log %36 : vector<16x1xf32>
    %38 = vector.broadcast %37 : vector<16x1xf32> to vector<16x128xf32>
    %39 = arith.subf %33, %38 : vector<16x128xf32>
    %40 = arith.subf %25, %39 : vector<16x128xf32>
    %41 = arith.mulf %29, %40 : vector<16x128xf32>
    %cst_10 = arith.constant 0.000000e+00 : f32
    %42 = vector.shape_cast %5 : vector<16x1xi1> to vector<16x1xi1>
    %43 = vector.broadcast %42 : vector<16x1xi1> to vector<16x128xi1>
    %44 = vector.broadcast %cst_10 : f32 to vector<16x128xf32>
    %45 = arith.select %43, %41, %44 : vector<16x128xi1>, vector<16x128xf32>
    %46 = vector.shape_cast %45 : vector<16x128xf32> to vector<1x16x128xf32>
    %cst_11 = arith.constant dense<0.000000e+00> : vector<1xf32>
    %47 = vector.multi_reduction <add>, %46, %cst_11 [1, 2] : vector<1x16x128xf32> to vector<1xf32>
    %48 = vector.shape_cast %47 : vector<1xf32> to vector<1x1x1xf32>
    %49 = vector.extract %48[0, 0, 0] : f32 from vector<1x1x1xf32>
    %50 = vector.broadcast %49 : f32 to vector<1x1x1xf32>
    %c0_12 = arith.constant 0 : index
    %c0_13 = arith.constant 0 : index
    %c0_14 = arith.constant 0 : index
    %51 = vector.load %arg3[%c0_12, %c0_13, %c0_14] : memref<1x1x1xf32, #tpu.memory_space<vmem>>, vector<1x1x1xf32>
    tpu.vector_store %arg3[%c0_12, %c0_13, %c0_14], %50 {strides = array<i32>} : memref<1x1x1xf32, #tpu.memory_space<vmem>>, vector<1x1x1xf32>,
    return
  }
  func.func @transform_0(%arg0: i32) -> (i32, i32) {
    %c0_i32 = arith.constant 0 : i32
    %c0_i32_0 = arith.constant 0 : i32
    return %arg0, %c0_i32 : i32, i32
  }
  func.func @transform_1(%arg0: i32) -> (i32, i32) {
    %c0_i32 = arith.constant 0 : i32
    %c0_i32_0 = arith.constant 0 : i32
    return %arg0, %c0_i32 : i32, i32
  }
  func.func @transform_2(%arg0: i32) -> (i32, i32, i32) {
    %c0_i32 = arith.constant 0 : i32
    %c0_i32_0 = arith.constant 0 : i32
    %c0_i32_1 = arith.constant 0 : i32
    return %arg0, %c0_i32, %c0_i32_0 : i32, i32, i32
  }
}

</mosaic_0001>

<llo_original>
// kernel: tpu_custom_call.1
$region0: #{tpu_custom_call.1}
  #allocation0 [shape = 'u32[]', space=smem, size = 0x4, offset = 0x4, fixed_abs, tag = 'smem constant byte address 0x4 - core index']
  #allocation1 [shape = 'u32[144,128]{1,0:T(1,128)}', space=vmem, size = 0x12000, scoped, tag = 'internal scratch']
  %s0 = inlined_call_operand.hbm [shape: f32[16,128], index: 0, kind: input, shape index: {}]
  %s1 = inlined_call_operand.hbm [shape: f32[16,128], index: 1, kind: input, shape index: {}]
  %s2 = inlined_call_operand.hbm [shape: f32[1,1,1], index: 2, kind: output, shape index: {}]
  %s3 = sld [smem:[#allocation0]]
  $region26: #{tpu_custom_call.1} parent=0
    _
  %s5 = ssub.s32 1, %s3
  %s6 = scalar_select 0, %s5, %s3
  $region1: #{tpu_custom_call.1} parent=0
    #allocation2 [shape = 'u8[8192]{0}', space=vmem, size = 0x2000, scoped, tag = 'input window, operand 0, single buffered']
    #allocation3 [shape = 's32[1]{0}', space=sflag, size = 0x4, scoped, tag = 'scoped memory for tpu_custom_call.1']
    #allocation4 [shape = 's32[1]{0}', space=sflag, size = 0x4, scoped, tag = 'scoped memory for tpu_custom_call.1']
    #allocation5 [shape = 'u8[8192]{0}', space=vmem, size = 0x2000, scoped, tag = 'input window, operand 1, single buffered']
    #allocation6 [shape = 's32[1]{0}', space=sflag, size = 0x4, scoped, tag = 'scoped memory for tpu_custom_call.1']
    #allocation7 [shape = 'u8[512]{0}', space=vmem, size = 0x400, scoped, tag = 'output window, operand 0, single buffered']
    %7 = vsyncpa [#allocation3], 0
    %8 = vsyncpa [#allocation6], 0
    %9 = vsyncpa [#allocation4], 0
    // Predicated region
    $region2: #{tpu_custom_call.1} parent=1 // pred_check
      _
    $region3: #{tpu_custom_call.1} parent=1 // pred_check_branch
      %11 = sbr.rel (0) target = $region5
    $region4: #{tpu_custom_call.1} parent=1 // pred_region
      %s13 = ssub.s32 256, 256
      %14 = vsyncadd [#allocation3], %s13
      %s15 = sshll.u32 [#allocation2], 4
      %s16 = int_to_ptr.vmem [resolvable:$true] %s15
      %21 = dma.hbm_to_vmem [thread:$0]  %s0, 256, %s16, [#allocation3], 128, 128, 8
    $region5: #{tpu_custom_call.1} parent=1 // pred_fallthru
      _
    // Predicated region
    $region6: #{tpu_custom_call.1} parent=1 // pred_check
      _
    $region7: #{tpu_custom_call.1} parent=1 // pred_check_branch
      %23 = sbr.rel (0) target = $region9
    $region8: #{tpu_custom_call.1} parent=1 // pred_region
      %s25 = ssub.s32 256, 256
      %26 = vsyncadd [#allocation6], %s25
      %s27 = sshll.u32 [#allocation5], 4
      %s28 = int_to_ptr.vmem [resolvable:$true] %s27
      %33 = dma.hbm_to_vmem [thread:$0]  %s1, 256, %s28, [#allocation6], 128, 128, 8
    $region9: #{tpu_custom_call.1} parent=1 // pred_fallthru
      _
    // Predicated region
    $region10: #{tpu_custom_call.1} parent=1 // pred_check
      _
    $region11: #{tpu_custom_call.1} parent=1 // pred_check_branch
      %35 = sbr.rel (0) target = $region13
    $region12: #{tpu_custom_call.1} parent=1 // pred_region
      %36 = dma.done [#allocation3], 256
    $region13: #{tpu_custom_call.1} parent=1 // pred_fallthru
      _
    // Predicated region
    $region14: #{tpu_custom_call.1} parent=1 // pred_check
      _
    $region15: #{tpu_custom_call.1} parent=1 // pred_check_branch
      %38 = sbr.rel (0) target = $region17
    $region16: #{tpu_custom_call.1} parent=1 // pred_region
      %39 = dma.done [#allocation6], 256
    $region17: #{tpu_custom_call.1} parent=1 // pred_fallthru
      _
    %s40 = smul.u32 0, 16
    %v41 = vlaneseq
    %v42 = vshrl.u32 %v41, 7
    %v43 = vadd.s32 %v42, 8
    %v44 = vstv %s40
    %v45 = vadd.s32 %v44, %v42
    %v46 = vadd.s32 %v44, %v43
    %vm47 = vcmp.lt.s32.totalorder %v45, 16
    %vm48 = vcmp.lt.s32.totalorder %v46, 16
    %v49 = vld [vmem:[#allocation2] sm:$0xff]
    %v50 = vld [vmem:[#allocation2 + $0x8] sm:$0xff]
    %v51 = vsel %vm47, 1, 0
    %v52 = vsel %vm48, 1, 0
    %vm53 = vcmp.eq.s32.totalorder %v51, 1
    %vm54 = vcmp.eq.s32.totalorder %v52, 1
    %v55 = vsel %vm53, %v49, 0.0
    %v56 = vsel %vm54, %v50, 0.0
    %v57 = vld [vmem:[#allocation5] sm:$0xff]
    %v58 = vld [vmem:[#allocation5 + $0x8] sm:$0xff]
    %v59 = vsel %vm53, %v57, 0.0
    %v60 = vsel %vm54, %v58, 0.0
    %61 = vmax.xlane.f32.xlu0 %v55
    %v62 = vpop.xlane.xlu0 %61
    %63 = vmax.xlane.f32.xlu0 %v56
    %v64 = vpop.xlane.xlu0 %63
    %v65 = vsub.f32 %v55, %v62
    %v66 = vsub.f32 %v56, %v64
    %v67 = vmul.f32 %v65, 1.442695
    %v68 = vpow.pop %v67
    %v69 = vmul.f32 %v66, 1.442695
    %v70 = vpow.pop %v69
    %71 = vadd.xlane.f32.xlu0 %v68
    %v72 = vpop.xlane.xlu0 %71
    %73 = vadd.xlane.f32.xlu0 %v70
    %v74 = vpop.xlane.xlu0 %73
    %v75 = vlog2.pop %v72
    %v76 = vmul.f32 %v75, 0.6931472
    %v77 = vlog2.pop %v74
    %v78 = vmul.f32 %v77, 0.6931472
    %v79 = vsub.f32 %v65, %v76
    %v80 = vsub.f32 %v66, %v78
    %v81 = vrcp.pop %v72
    %v82 = vmul.f32 1.0, %v81
    %v83 = vrcp.pop %v74
    %v84 = vmul.f32 1.0, %v83
    %v85 = vmul.f32 %v68, %v82
    %v86 = vmul.f32 %v70, %v84
    %87 = vmax.xlane.f32.xlu0 %v59
    %v88 = vpop.xlane.xlu0 %87
    %89 = vmax.xlane.f32.xlu0 %v60
    %v90 = vpop.xlane.xlu0 %89
    %v91 = vsub.f32 %v59, %v88
    %v92 = vsub.f32 %v60, %v90
    %v93 = vmul.f32 %v91, 1.442695
    %v94 = vpow.pop %v93
    %v95 = vmul.f32 %v92, 1.442695
    %v96 = vpow.pop %v95
    %97 = vadd.xlane.f32.xlu0 %v94
    %v98 = vpop.xlane.xlu0 %97
    %99 = vadd.xlane.f32.xlu0 %v96
    %v100 = vpop.xlane.xlu0 %99
    %v101 = vlog2.pop %v98
    %v102 = vmul.f32 %v101, 0.6931472
    %v103 = vlog2.pop %v100
    %v104 = vmul.f32 %v103, 0.6931472
    %v105 = vsub.f32 %v91, %v102
    %v106 = vsub.f32 %v92, %v104
    %v107 = vsub.f32 %v79, %v105
    %v108 = vsub.f32 %v80, %v106
    %v109 = vmul.f32 %v85, %v107
    %v110 = vmul.f32 %v86, %v108
    %v111 = vsel %vm53, %v109, 0.0
    %v112 = vsel %vm54, %v110, 0.0
    %v113 = vadd.f32 %v111, %v112
    %114 = vadd.xlane.f32.xlu0 %v113
    %v115 = vpop.xlane.xlu0 %114
    %v116 = vrot.slane %v115, 4
    %v117 = vadd.f32 %v115, %v116
    %v118 = vrot.slane %v117, 2
    %v119 = vadd.f32 %v117, %v118
    %v120 = vrot.slane %v119, 1
    %v121 = vadd.f32 %v119, %v120
    %s122 = vtos %v121
    %v123 = vstv %s122
    %vm124 = vcmask 0
    %125 = vst.msk [vmem:[#allocation7] sm:$0x1] %vm124, %v123
    // Predicated region
    $region18: #{tpu_custom_call.1} parent=1 // pred_check
      _
    $region19: #{tpu_custom_call.1} parent=1 // pred_check_branch
      %127 = sbr.rel (0) target = $region21
    $region20: #{tpu_custom_call.1} parent=1 // pred_region
      %s129 = ssub.s32 16, 16
      %130 = vsyncadd [#allocation4], %s129
      %s132 = sshll.u32 [#allocation7], 4
      %s133 = int_to_ptr.vmem [resolvable:$true] %s132
      %135 = dma.vmem_to_hbm [thread:$0]  %s133, 16, %s2, [#allocation4]
    $region21: #{tpu_custom_call.1} parent=1 // pred_fallthru
      _
    // Predicated region
    $region22: #{tpu_custom_call.1} parent=1 // pred_check
      _
    $region23: #{tpu_custom_call.1} parent=1 // pred_check_branch
      %137 = sbr.rel (0) target = $region25
    $region24: #{tpu_custom_call.1} parent=1 // pred_region
      %138 = dma.done [#allocation4], 16
    $region25: #{tpu_custom_call.1} parent=1 // pred_fallthru
      _
    %139 = vsyncpa [#allocation3], 1
    %140 = vsyncpa [#allocation6], 1
    %141 = vsyncpa [#allocation4], 1

</llo_original>
